<compile_context>
chip_gen: v6e
topology: v6e:2x2x1
jax: 0.10.0
libtpu: 0.0.40
codegen_flags: <defaults>
</compile_context>

<pallas_src>
import functools

import numpy as np

import jax
import jax.numpy as jnp
from jax.experimental import pallas as pl
from jax.experimental.pallas import tpu as pltpu


def _bilinear_matrix(out_size: int, in_size: int) -> np.ndarray:
    """Interpolation matrix M (out_size, in_size): y = M @ x, bilinear,
    align_corners=False, edge-clamped (same math as torch F.interpolate).
    Built with host numpy so it becomes a compile-time constant under jit."""
    o = np.arange(out_size, dtype=np.float64)
    src = (o + 0.5) * (in_size / out_size) - 0.5
    i0 = np.floor(src)
    frac = (src - i0).astype(np.float32)
    i0c = np.clip(i0.astype(np.int64), 0, in_size - 1)
    i1c = np.clip(i0.astype(np.int64) + 1, 0, in_size - 1)
    m = np.zeros((out_size, in_size), dtype=np.float32)
    rows = np.arange(out_size)
    np.add.at(m, (rows, i0c), 1.0 - frac)   # duplicates (edge clamp) sum to 1.0
    np.add.at(m, (rows, i1c), frac)
    return m


def _resize_kernel(x_ref, wy_ref, wxt_ref, o_ref):
    # x_ref:   (tb, H_in,  W_in)   input dtype
    # wy_ref:  (H_out, H_in)       bf16  (height interpolation matrix)
    # wxt_ref: (W_in,  W_out)      bf16  (width interpolation matrix, pre-transposed)
    # o_ref:   (tb, H_out, W_out)  output dtype
    wy = wy_ref[...]
    wxt = wxt_ref[...]
    for i in range(x_ref.shape[0]):          # static unroll over planes in the tile
        xp = x_ref[i].astype(jnp.bfloat16)                            # (H_in, W_in)
        z = jnp.dot(xp, wxt, preferred_element_type=jnp.float32)      # (H_in, W_out)
        o = jnp.dot(wy, z.astype(jnp.bfloat16),
                    preferred_element_type=jnp.float32)               # (H_out, W_out)
        o_ref[i] = o.astype(o_ref.dtype)


def _pick_plane_tile(b: int, h_in: int, w_in: int, h_out: int, w_out: int) -> int:
    """Largest per-step plane count <= 8 that divides b, fits VMEM and keeps
    >= 2 grid steps when possible (v7x megacore)."""
    plane_bytes = 4 * (h_in * w_in + h_out * w_out) * 2 + 4 * h_in * w_out
    cap = max(1, min(8, (12 * 1024 * 1024) // max(plane_bytes, 1)))
    if b >= 2:
        cap = min(cap, -(-b // 2))           # ensure at least 2 grid steps
    cap = min(cap, b)
    for t in range(cap, 0, -1):
        if b % t == 0:
            return t
    return 1


@functools.partial(jax.jit, static_argnames=("h_out", "w_out"))
def _pallas_bilinear_resize(x, h_out: int, w_out: int):
    """x: (N, C, H, W) -> (N, C, h_out, w_out), bilinear (align_corners=False)."""
    n, c, h_in, w_in = x.shape
    b = n * c
    xp = x.reshape(b, h_in, w_in)            # free, contiguous reshape

    # Interpolation matrices: compile-time constants (h_out / w_out are static).
    wy = jnp.asarray(_bilinear_matrix(h_out, h_in), dtype=jnp.bfloat16)      # (H_out, H_in)
    wxt = jnp.asarray(_bilinear_matrix(w_out, w_in).T, dtype=jnp.bfloat16)   # (W_in, W_out)

    tb = _pick_plane_tile(b, h_in, w_in, h_out, w_out)

    out = pl.pallas_call(
        _resize_kernel,
        out_shape=jax.ShapeDtypeStruct((b, h_out, w_out), x.dtype),
        grid_spec=pltpu.PrefetchScalarGridSpec(
            num_scalar_prefetch=0,
            grid=(b // tb,),
            in_specs=[
                pl.BlockSpec((tb, h_in, w_in), lambda i: (i, 0, 0)),
                pl.BlockSpec((h_out, h_in), lambda i: (0, 0)),
                pl.BlockSpec((w_in, w_out), lambda i: (0, 0)),
            ],
            out_specs=pl.BlockSpec((tb, h_out, w_out), lambda i: (i, 0, 0)),
        ),
        compiler_params=pltpu.CompilerParams(
            dimension_semantics=("parallel",),
            vmem_limit_bytes=32 * 1024 * 1024,
        ),
    )(xp, wy, wxt)

    return out.reshape(n, c, h_out, w_out)


class RandomScaleTransform:
    """JAX/Pallas port of the PyTorch RandomScaleTransform module."""

    def __init__(self, scales, seed=0):
        self.scales = list(scales)
        # Host-side RNG for the scale pick: no device->host sync per call.
        self._rng = np.random.default_rng(seed)

    def __call__(self, x):
        assert x.ndim == 4  # NCHW
        rand_n = int(self._rng.integers(0, len(self.scales)))
        scale = self.scales[rand_n]
        h_out = int(x.shape[2] * scale)      # matches int(el * scale) in the spec
        w_out = int(x.shape[3] * scale)
        return _pallas_bilinear_resize(x, h_out, w_out)


if __name__ == "__main__":
    key = jax.random.PRNGKey(0)

    # Small deterministic input: N=2, C=4, H=W=16 (NCHW).
    x = jax.random.normal(key, (2, 4, 16, 16), dtype=jnp.float32)

    transform = RandomScaleTransform(scales=[0.5, 0.75, 1.25, 1.5], seed=0)
    y = jax.block_until_ready(transform(x))

    # Sanity: output keeps N, C and dtype; spatial dims rescaled.
    assert y.shape[:2] == x.shape[:2]
    assert y.dtype == x.dtype

    # Numerical sanity: compare against a pure-JAX f32 reference of the same
    # bilinear math (tolerance accounts for bf16 MXU inputs / intermediate).
    h_out, w_out = int(y.shape[2]), int(y.shape[3])
    wy = jnp.asarray(_bilinear_matrix(h_out, x.shape[2]))
    wx = jnp.asarray(_bilinear_matrix(w_out, x.shape[3]))
    ref = jnp.einsum("oh,nchw,pw->ncop", wy, x, wx)
    err = float(jnp.max(jnp.abs(y - ref)))
    assert err < 0.1, f"max abs err too large: {err}"

    print("KERNEL_OK")
</pallas_src>

<mosaic_0001>
module attributes {stable_mosaic.version = 11 : i64} {
  func.func @_resize_kernel(%arg0: i32, %arg1: memref<4x16x16xf32, #tpu.memory_space<vmem>>, %arg2: memref<24x16xbf16, #tpu.memory_space<vmem>>, %arg3: memref<16x24xbf16, #tpu.memory_space<vmem>>, %arg4: memref<4x24x24xf32, #tpu.memory_space<vmem>>) attributes {dimension_semantics = [#tpu.dimension_semantics<parallel>], iteration_bounds = array<i64: 2>, scalar_prefetch = 0 : i64, scratch_operands = 0 : i64, tpu.core_type = #tpu.core_type<tc>, window_params = [{transform_indices = @transform_0, window_bounds = array<i64: 4, 16, 16>}, {pipeline_mode = #tpu.pipeline_mode<synchronous>, transform_indices = @transform_1, window_bounds = array<i64: 24, 16>}, {pipeline_mode = #tpu.pipeline_mode<synchronous>, transform_indices = @transform_2, window_bounds = array<i64: 16, 24>}, {transform_indices = @transform_3, window_bounds = array<i64: 4, 24, 24>}]} {
    %c0 = arith.constant 0 : index
    %c0_0 = arith.constant 0 : index
    %0 = vector.load %arg2[%c0, %c0_0] : memref<24x16xbf16, #tpu.memory_space<vmem>>, vector<24x16xbf16>
    %c0_1 = arith.constant 0 : index
    %c0_2 = arith.constant 0 : index
    %1 = vector.load %arg3[%c0_1, %c0_2] : memref<16x24xbf16, #tpu.memory_space<vmem>>, vector<16x24xbf16>
    %c0_3 = arith.constant 0 : index
    %c0_4 = arith.constant 0 : index
    %c0_5 = arith.constant 0 : index
    %2 = vector.load %arg1[%c0_3, %c0_4, %c0_5] : memref<4x16x16xf32, #tpu.memory_space<vmem>>, vector<1x16x16xf32>
    %3 = vector.shape_cast %2 : vector<1x16x16xf32> to vector<16x16xf32>
    %4 = arith.truncf %3 : vector<16x16xf32> to vector<16x16xbf16>
    %cst = arith.constant dense<0.000000e+00> : vector<16x24xf32>
    %5 = tpu.matmul %4, %1, %cst {dimension_numbers = #tpu.dot_dimension_numbers<[1], [0], [0], [1], [0, 0, 1, 1], [], []>} : vector<16x16xbf16>, vector<16x24xbf16>, vector<16x24xf32> -> vector<16x24xf32>
    %6 = arith.truncf %5 : vector<16x24xf32> to vector<16x24xbf16>
    %cst_6 = arith.constant dense<0.000000e+00> : vector<24x24xf32>
    %7 = tpu.matmul %0, %6, %cst_6 {dimension_numbers = #tpu.dot_dimension_numbers<[1], [0], [0], [1], [0, 0, 1, 1], [], []>} : vector<24x16xbf16>, vector<16x24xbf16>, vector<24x24xf32> -> vector<24x24xf32>
    %c0_7 = arith.constant 0 : index
    %c0_8 = arith.constant 0 : index
    %c0_9 = arith.constant 0 : index
    %8 = vector.load %arg4[%c0_7, %c0_8, %c0_9] : memref<4x24x24xf32, #tpu.memory_space<vmem>>, vector<1x24x24xf32>
    %9 = vector.shape_cast %8 : vector<1x24x24xf32> to vector<24x24xf32>
    %10 = vector.shape_cast %7 : vector<24x24xf32> to vector<1x24x24xf32>
    tpu.vector_store %arg4[%c0_7, %c0_8, %c0_9], %10 {strides = array<i32>} : memref<4x24x24xf32, #tpu.memory_space<vmem>>, vector<1x24x24xf32>,
    %c1 = arith.constant 1 : index
    %c0_10 = arith.constant 0 : index
    %c0_11 = arith.constant 0 : index
    %11 = vector.load %arg1[%c1, %c0_10, %c0_11] : memref<4x16x16xf32, #tpu.memory_space<vmem>>, vector<1x16x16xf32>
    %12 = vector.shape_cast %11 : vector<1x16x16xf32> to vector<16x16xf32>
    %13 = arith.truncf %12 : vector<16x16xf32> to vector<16x16xbf16>
    %cst_12 = arith.constant dense<0.000000e+00> : vector<16x24xf32>
    %14 = tpu.matmul %13, %1, %cst_12 {dimension_numbers = #tpu.dot_dimension_numbers<[1], [0], [0], [1], [0, 0, 1, 1], [], []>} : vector<16x16xbf16>, vector<16x24xbf16>, vector<16x24xf32> -> vector<16x24xf32>
    %15 = arith.truncf %14 : vector<16x24xf32> to vector<16x24xbf16>
    %cst_13 = arith.constant dense<0.000000e+00> : vector<24x24xf32>
    %16 = tpu.matmul %0, %15, %cst_13 {dimension_numbers = #tpu.dot_dimension_numbers<[1], [0], [0], [1], [0, 0, 1, 1], [], []>} : vector<24x16xbf16>, vector<16x24xbf16>, vector<24x24xf32> -> vector<24x24xf32>
    %c1_14 = arith.constant 1 : index
    %c0_15 = arith.constant 0 : index
    %c0_16 = arith.constant 0 : index
    %17 = vector.load %arg4[%c1_14, %c0_15, %c0_16] : memref<4x24x24xf32, #tpu.memory_space<vmem>>, vector<1x24x24xf32>
    %18 = vector.shape_cast %17 : vector<1x24x24xf32> to vector<24x24xf32>
    %19 = vector.shape_cast %16 : vector<24x24xf32> to vector<1x24x24xf32>
    tpu.vector_store %arg4[%c1_14, %c0_15, %c0_16], %19 {strides = array<i32>} : memref<4x24x24xf32, #tpu.memory_space<vmem>>, vector<1x24x24xf32>,
    %c2 = arith.constant 2 : index
    %c0_17 = arith.constant 0 : index
    %c0_18 = arith.constant 0 : index
    %20 = vector.load %arg1[%c2, %c0_17, %c0_18] : memref<4x16x16xf32, #tpu.memory_space<vmem>>, vector<1x16x16xf32>
    %21 = vector.shape_cast %20 : vector<1x16x16xf32> to vector<16x16xf32>
    %22 = arith.truncf %21 : vector<16x16xf32> to vector<16x16xbf16>
    %cst_19 = arith.constant dense<0.000000e+00> : vector<16x24xf32>
    %23 = tpu.matmul %22, %1, %cst_19 {dimension_numbers = #tpu.dot_dimension_numbers<[1], [0], [0], [1], [0, 0, 1, 1], [], []>} : vector<16x16xbf16>, vector<16x24xbf16>, vector<16x24xf32> -> vector<16x24xf32>
    %24 = arith.truncf %23 : vector<16x24xf32> to vector<16x24xbf16>
    %cst_20 = arith.constant dense<0.000000e+00> : vector<24x24xf32>
    %25 = tpu.matmul %0, %24, %cst_20 {dimension_numbers = #tpu.dot_dimension_numbers<[1], [0], [0], [1], [0, 0, 1, 1], [], []>} : vector<24x16xbf16>, vector<16x24xbf16>, vector<24x24xf32> -> vector<24x24xf32>
    %c2_21 = arith.constant 2 : index
    %c0_22 = arith.constant 0 : index
    %c0_23 = arith.constant 0 : index
    %26 = vector.load %arg4[%c2_21, %c0_22, %c0_23] : memref<4x24x24xf32, #tpu.memory_space<vmem>>, vector<1x24x24xf32>
    %27 = vector.shape_cast %26 : vector<1x24x24xf32> to vector<24x24xf32>
    %28 = vector.shape_cast %25 : vector<24x24xf32> to vector<1x24x24xf32>
    tpu.vector_store %arg4[%c2_21, %c0_22, %c0_23], %28 {strides = array<i32>} : memref<4x24x24xf32, #tpu.memory_space<vmem>>, vector<1x24x24xf32>,
    %c3 = arith.constant 3 : index
    %c0_24 = arith.constant 0 : index
    %c0_25 = arith.constant 0 : index
    %29 = vector.load %arg1[%c3, %c0_24, %c0_25] : memref<4x16x16xf32, #tpu.memory_space<vmem>>, vector<1x16x16xf32>
    %30 = vector.shape_cast %29 : vector<1x16x16xf32> to vector<16x16xf32>
    %31 = arith.truncf %30 : vector<16x16xf32> to vector<16x16xbf16>
    %cst_26 = arith.constant dense<0.000000e+00> : vector<16x24xf32>
    %32 = tpu.matmul %31, %1, %cst_26 {dimension_numbers = #tpu.dot_dimension_numbers<[1], [0], [0], [1], [0, 0, 1, 1], [], []>} : vector<16x16xbf16>, vector<16x24xbf16>, vector<16x24xf32> -> vector<16x24xf32>
    %33 = arith.truncf %32 : vector<16x24xf32> to vector<16x24xbf16>
    %cst_27 = arith.constant dense<0.000000e+00> : vector<24x24xf32>
    %34 = tpu.matmul %0, %33, %cst_27 {dimension_numbers = #tpu.dot_dimension_numbers<[1], [0], [0], [1], [0, 0, 1, 1], [], []>} : vector<24x16xbf16>, vector<16x24xbf16>, vector<24x24xf32> -> vector<24x24xf32>
    %c3_28 = arith.constant 3 : index
    %c0_29 = arith.constant 0 : index
    %c0_30 = arith.constant 0 : index
    %35 = vector.load %arg4[%c3_28, %c0_29, %c0_30] : memref<4x24x24xf32, #tpu.memory_space<vmem>>, vector<1x24x24xf32>
    %36 = vector.shape_cast %35 : vector<1x24x24xf32> to vector<24x24xf32>
    %37 = vector.shape_cast %34 : vector<24x24xf32> to vector<1x24x24xf32>
    tpu.vector_store %arg4[%c3_28, %c0_29, %c0_30], %37 {strides = array<i32>} : memref<4x24x24xf32, #tpu.memory_space<vmem>>, vector<1x24x24xf32>,
    return
  }
  func.func @transform_0(%arg0: i32) -> (i32, i32, i32) {
    %c0_i32 = arith.constant 0 : i32
    %c0_i32_0 = arith.constant 0 : i32
    %c0_i32_1 = arith.constant 0 : i32
    return %arg0, %c0_i32, %c0_i32_0 : i32, i32, i32
  }
  func.func @transform_1(%arg0: i32) -> (i32, i32) {
    %c0_i32 = arith.constant 0 : i32
    %c0_i32_0 = arith.constant 0 : i32
    %c0_i32_1 = arith.constant 0 : i32
    return %c0_i32, %c0_i32_0 : i32, i32
  }
  func.func @transform_2(%arg0: i32) -> (i32, i32) {
    %c0_i32 = arith.constant 0 : i32
    %c0_i32_0 = arith.constant 0 : i32
    %c0_i32_1 = arith.constant 0 : i32
    return %c0_i32, %c0_i32_0 : i32, i32
  }
  func.func @transform_3(%arg0: i32) -> (i32, i32, i32) {
    %c0_i32 = arith.constant 0 : i32
    %c0_i32_0 = arith.constant 0 : i32
    %c0_i32_1 = arith.constant 0 : i32
    return %arg0, %c0_i32, %c0_i32_0 : i32, i32, i32
  }
}

</mosaic_0001>

<llo_original>
// kernel: _pallas_bilinear_resize.1
$region0: #{_pallas_bilinear_resize.1}
  #allocation0 [shape = 'u32[]', space=smem, size = 0x4, offset = 0x4, fixed_abs, tag = 'smem constant byte address 0x4 - core index']
  #allocation1 [shape = 'u32[144,128]{1,0:T(1,128)}', space=vmem, size = 0x12000, scoped, tag = 'internal scratch']
  %s0 = inlined_call_operand.hbm [shape: f32[8,16,16], index: 0, kind: input, shape index: {}]
  %s1 = inlined_call_operand.hbm [shape: bf16[24,16], index: 1, kind: input, shape index: {}]
  %s2 = inlined_call_operand.hbm [shape: bf16[16,24], index: 2, kind: input, shape index: {}]
  %s3 = inlined_call_operand.hbm [shape: f32[8,24,24], index: 3, kind: output, shape index: {}]
  %s4 = sld [smem:[#allocation0]]
  $region57: #{_pallas_bilinear_resize.1} parent=0
    _
  %s6 = ssub.s32 1, %s4
  %s7 = scalar_select 0, %s6, %s4
  $region1: #{_pallas_bilinear_resize.1} parent=0
    #allocation2 [shape = 'u8[65536]{0}', space=vmem, size = 0x10000, scoped, tag = 'input window, operand 0']
    #allocation3 [shape = 's32[2]{0}', space=sflag, size = 0x8, scoped, tag = 'scoped memory for _pallas_bilinear_resize.1']
    #allocation4 [shape = 's32[2]{0}', space=sflag, size = 0x8, scoped, tag = 'scoped memory for _pallas_bilinear_resize.1']
    #allocation5 [shape = 'u8[6144]{0}', space=vmem, size = 0x1800, scoped, tag = 'input window, operand 1, single buffered']
    #allocation6 [shape = 's32[1]{0}', space=sflag, size = 0x4, scoped, tag = 'scoped memory for _pallas_bilinear_resize.1']
    #allocation7 [shape = 'u8[4096]{0}', space=vmem, size = 0x1000, scoped, tag = 'input window, operand 2, single buffered']
    #allocation8 [shape = 'u8[98304]{0}', space=vmem, size = 0x18000, scoped, tag = 'output window, operand 0']
    %8 = vsyncpa [#allocation3], 0
    %s9 = scalar_lea.sflag [#allocation3], 1
    %10 = vsyncpa %s9, 0
    %11 = vsyncpa [#allocation6], 0
    %12 = vsyncpa [#allocation4], 0
    %s13 = scalar_lea.sflag [#allocation4], 1
    %14 = vsyncpa %s13, 0
    loop: start=0, step=1, limit=4
    $region2: #{_pallas_bilinear_resize.1} parent=1 // loop_pre_header
      _
    $region3: #{_pallas_bilinear_resize.1} parent=1 // loop_header
      %s16 = sphi 0, %s20
      %p17 = scmp.ge.s32.totalorder %s16, 4
      %s26 = sphi 0, %s28
      %s29 = sphi 0, %s26
      %s30 = sphi 0, %s29
      %s46 = sphi 0, %s30
      %s50 = sphi 0, %s50
      %s52 = sphi 0, %s50
      %s53 = sphi 0, %s52
      %s67 = sphi 0, %s53
      %s71 = sphi 0, %s71
      %s73 = sphi 0, %s71
      %s74 = sphi 0, %s73
      %s88 = sphi 0, %s74
      %s94 = sphi 0, %s96
      %s97 = sphi 0, %s94
      %s98 = sphi 0, %s97
      %s114 = sphi 0, %s98
    $region4: #{_pallas_bilinear_resize.1} parent=1 // loop_header_branch
      %19 = sbr.rel (%p17) target = $region8
    $region5: #{_pallas_bilinear_resize.1} parent=1 // loop_body
      %s21 = ssub.s32 %s16, 1
      %s22 = ssub.s32 %s16, 2
      %s23 = sadd.s32 %s16, 1
      %s24 = ssub.s32 %s16, %s23
      %p25 = scmp.eq.s32.totalorder %s24, 0
      %s27 = sadd.s32 %s26, 1
      %s28 = scalar_select %p25, %s26, %s27
      %p31 = pneg %p25
      %p32 = scmp.eq.s32.totalorder %s16, 1
      %p33 = por %p31, %p32
      %p34 = scmp.ne.s32.totalorder %s26, %s29
      %p35 = scmp.eq.s32.totalorder %s16, 0
      %p36 = por %p34, %p35
      %p37 = scmp.ne.s32.totalorder %s26, %s29
      %p38 = scmp.eq.s32.totalorder %s21, 1
      %p39 = por %p37, %p38
      %p40 = scmp.ne.s32.totalorder %s29, %s30
      %p41 = scmp.eq.s32.totalorder %s21, 0
      %p42 = por %p40, %p41
      %p43 = scmp.ne.s32.totalorder %s29, %s30
      %p44 = scmp.eq.s32.totalorder %s22, 1
      %p45 = por %p43, %p44
      %p47 = scmp.ne.s32.totalorder %s30, %s46
      %p48 = scmp.eq.s32.totalorder %s22, 0
      %p49 = por %p47, %p48
      %s51 = sadd.s32 %s50, 1
      %p54 = scmp.eq.s32.totalorder %s16, 1
      %p55 = scmp.ne.s32.totalorder %s50, %s52
      %p56 = scmp.eq.s32.totalorder %s16, 0
      %p57 = por %p55, %p56
      %p58 = scmp.ne.s32.totalorder %s50, %s52
      %p59 = scmp.eq.s32.totalorder %s21, 1
      %p60 = por %p58, %p59
      %p61 = scmp.ne.s32.totalorder %s52, %s53
      %p62 = scmp.eq.s32.totalorder %s21, 0
      %p63 = por %p61, %p62
      %p64 = scmp.ne.s32.totalorder %s52, %s53
      %p65 = scmp.eq.s32.totalorder %s22, 1
      %p66 = por %p64, %p65
      %p68 = scmp.ne.s32.totalorder %s53, %s67
      %p69 = scmp.eq.s32.totalorder %s22, 0
      %p70 = por %p68, %p69
      %s72 = sadd.s32 %s71, 1
      %p75 = scmp.eq.s32.totalorder %s16, 1
      %p76 = scmp.ne.s32.totalorder %s71, %s73
      %p77 = scmp.eq.s32.totalorder %s16, 0
      %p78 = por %p76, %p77
      %p79 = scmp.ne.s32.totalorder %s71, %s73
      %p80 = scmp.eq.s32.totalorder %s21, 1
      %p81 = por %p79, %p80
      %p82 = scmp.ne.s32.totalorder %s73, %s74
      %p83 = scmp.eq.s32.totalorder %s21, 0
      %p84 = por %p82, %p83
      %p85 = scmp.ne.s32.totalorder %s73, %s74
      %p86 = scmp.eq.s32.totalorder %s22, 1
      %p87 = por %p85, %p86
      %p89 = scmp.ne.s32.totalorder %s74, %s88
      %p90 = scmp.eq.s32.totalorder %s22, 0
      %p91 = por %p89, %p90
      %s92 = ssub.s32 %s16, %s23
      %p93 = scmp.eq.s32.totalorder %s92, 0
      %s95 = sadd.s32 %s94, 1
      %s96 = scalar_select %p93, %s94, %s95
      %p99 = pneg %p93
      %p100 = scmp.eq.s32.totalorder %s16, 1
      %p101 = por %p99, %p100
      %p102 = scmp.ne.s32.totalorder %s94, %s97
      %p103 = scmp.eq.s32.totalorder %s16, 0
      %p104 = por %p102, %p103
      %p105 = scmp.ne.s32.totalorder %s94, %s97
      %p106 = scmp.eq.s32.totalorder %s21, 1
      %p107 = por %p105, %p106
      %p108 = scmp.ne.s32.totalorder %s97, %s98
      %p109 = scmp.eq.s32.totalorder %s21, 0
      %p110 = por %p108, %p109
      %p111 = scmp.ne.s32.totalorder %s97, %s98
      %p112 = scmp.eq.s32.totalorder %s22, 1
      %p113 = por %p111, %p112
      %p115 = scmp.ne.s32.totalorder %s98, %s114
      %p116 = scmp.eq.s32.totalorder %s22, 0
      %p117 = por %p115, %p116
      %p118 = scmp.le.s32.totalorder 1, %s16
      %p119 = scmp.lt.s32.totalorder %s16, 3
      %p120 = pnand %p118, %p119
      %p121 = pneg %p120
      // Predicated region
      $region9: #{_pallas_bilinear_resize.1} parent=5 // pred_check
        _
      $region10: #{_pallas_bilinear_resize.1} parent=5 // pred_check_branch
        %123 = sbr.rel (%p120) target = $region12
      $region11: #{_pallas_bilinear_resize.1} parent=5 // pred_region
        %s124 = ssub.s32 %s16, 1
        // Predicated region
        $region13: #{_pallas_bilinear_resize.1} parent=11 // pred_check
          %p125 = pneg %p63
        $region14: #{_pallas_bilinear_resize.1} parent=11 // pred_check_branch
          %127 = sbr.rel (%p125) target = $region16
        $region15: #{_pallas_bilinear_resize.1} parent=11 // pred_region
          %s129 = ssub.s32 192, 192
          %130 = vsyncadd [#allocation6], %s129
          %s131 = sshll.u32 [#allocation5], 4
          %s132 = int_to_ptr.vmem [resolvable:$true] %s131
          %137 = dma.hbm_to_vmem [thread:$0]  %s1, 192, %s132, [#allocation6], 64, 64, 4
        $region16: #{_pallas_bilinear_resize.1} parent=11 // pred_fallthru
          _
        // Predicated region
        $region17: #{_pallas_bilinear_resize.1} parent=11 // pred_check
          %p138 = pneg %p84
        $region18: #{_pallas_bilinear_resize.1} parent=11 // pred_check_branch
          %140 = sbr.rel (%p138) target = $region20
        $region19: #{_pallas_bilinear_resize.1} parent=11 // pred_region
          %s142 = ssub.s32 128, 128
          %143 = vsyncadd [#allocation6], %s142
          %s144 = sshll.u32 [#allocation7], 4
          %s145 = int_to_ptr.vmem [resolvable:$true] %s144
          %150 = dma.hbm_to_vmem [thread:$0]  %s2, 128, %s145, [#allocation6], 64, 64, 4
        $region20: #{_pallas_bilinear_resize.1} parent=11 // pred_fallthru
          _
      $region12: #{_pallas_bilinear_resize.1} parent=5 // pred_fallthru
        _
      %p151 = scmp.lt.s32.totalorder %s16, 2
      // Predicated region
      $region21: #{_pallas_bilinear_resize.1} parent=5 // pred_check
        %p152 = pneg %p151
      $region22: #{_pallas_bilinear_resize.1} parent=5 // pred_check_branch
        %154 = sbr.rel (%p152) target = $region24
      $region23: #{_pallas_bilinear_resize.1} parent=5 // pred_region
        // Predicated region
        $region25: #{_pallas_bilinear_resize.1} parent=23 // pred_check
          %p155 = pneg %p36
        $region26: #{_pallas_bilinear_resize.1} parent=23 // pred_check_branch
          %157 = sbr.rel (%p155) target = $region28
        $region27: #{_pallas_bilinear_resize.1} parent=23 // pred_region
          %s158 = sand.u32 %s26, 1
          %s159 = scalar_lea.sflag [#allocation3], %s158
          %s160 = sand.u32 %s26, 1
          %s161 = smul.addr %s160, 64
          %s162 = scalar_lea.vmem [#allocation2], %s161
          %s163 = smul.u32 4, %s16
          %s165 = ssub.s32 1024, 1024
          %166 = vsyncadd %s159, %s165
          %s167 = smul.addr %s163, 2
          %s168 = smul.addr %s167, 128
          %s169 = scalar_lea.hbm %s0, %s168
          %s170 = sshll.u32 %s162, 4
          %s171 = int_to_ptr.vmem [resolvable:$true] %s170
          %176 = dma.hbm_to_vmem [thread:$0]  %s169, 1024, %s171, %s159, 128, 128, 8
        $region28: #{_pallas_bilinear_resize.1} parent=23 // pred_fallthru
          _
      $region24: #{_pallas_bilinear_resize.1} parent=5 // pred_fallthru
        _
      %p177 = scmp.le.s32.totalorder 1, %s16
      %p178 = scmp.lt.s32.totalorder %s16, 3
      %p179 = pnand %p177, %p178
      %p180 = pneg %p179
      // Predicated region
      $region29: #{_pallas_bilinear_resize.1} parent=5 // pred_check
        _
      $region30: #{_pallas_bilinear_resize.1} parent=5 // pred_check_branch
        %182 = sbr.rel (%p179) target = $region32
      $region31: #{_pallas_bilinear_resize.1} parent=5 // pred_region
        %s183 = ssub.s32 %s16, 1
        %s184 = sand.u32 %s29, 1
        %s185 = scalar_lea.sflag [#allocation3], %s184
        %s186 = sand.u32 %s29, 1
        %s187 = smul.addr %s186, 64
        %s188 = scalar_lea.vmem [#allocation2], %s187
        // Predicated region
        $region33: #{_pallas_bilinear_resize.1} parent=31 // pred_check
          %p189 = pneg %p42
        $region34: #{_pallas_bilinear_resize.1} parent=31 // pred_check_branch
          %191 = sbr.rel (%p189) target = $region36
        $region35: #{_pallas_bilinear_resize.1} parent=31 // pred_region
          %192 = dma.done %s185, 1024
        $region36: #{_pallas_bilinear_resize.1} parent=31 // pred_fallthru
          _
        // Predicated region
        $region37: #{_pallas_bilinear_resize.1} parent=31 // pred_check
          %p193 = pneg %p63
        $region38: #{_pallas_bilinear_resize.1} parent=31 // pred_check_branch
          %195 = sbr.rel (%p193) target = $region40
        $region39: #{_pallas_bilinear_resize.1} parent=31 // pred_region
          %196 = dma.done [#allocation6], 192
        $region40: #{_pallas_bilinear_resize.1} parent=31 // pred_fallthru
          _
        // Predicated region
        $region41: #{_pallas_bilinear_resize.1} parent=31 // pred_check
          %p197 = pneg %p84
        $region42: #{_pallas_bilinear_resize.1} parent=31 // pred_check_branch
          %199 = sbr.rel (%p197) target = $region44
        $region43: #{_pallas_bilinear_resize.1} parent=31 // pred_region
          %200 = dma.done [#allocation6], 128
        $region44: #{_pallas_bilinear_resize.1} parent=31 // pred_fallthru
          _
        %s201 = sand.u32 %s29, 1
        %s202 = scalar_lea.sflag [#allocation3], %s201
        %s203 = sand.u32 %s29, 1
        %s204 = smul.addr %s203, 64
        %s205 = scalar_lea.vmem [#allocation2], %s204
        %p206 = pneg %p42
        %p207 = pneg %p39
        %p208 = pneg %p63
        %p209 = pneg %p60
        %p210 = pneg %p84
        %p211 = pneg %p81
        %p212 = pneg %p110
        %p213 = pneg %p107
        %s214 = sand.u32 %s97, 1
        %s215 = scalar_lea.sflag [#allocation4], %s214
        %s216 = sand.u32 %s97, 1
        %s217 = smul.addr %s216, 96
        %s218 = scalar_lea.vmem [#allocation8], %s217
        %s219 = smul.u32 4, %s21
        %s220 = smul.u32 4, %s21
        %v222 = vld [vmem:[#allocation5] sm:$0xf]
        %v223 = vld [vmem:[#allocation5 + $0x4] sm:$0xf]
        %v224 = vld [vmem:[#allocation5 + $0x8] sm:$0xf]
        %v225 = vld [vmem:[#allocation7] sm:$0xf]
        %v226 = vld [vmem:[#allocation7 + $0x4] sm:$0xf]
        %v227 = vld [vmem:[%s188] sm:$0xff]
        %v228 = vld [vmem:[%s188 + $0x8] sm:$0xff]
        %v229 = vpack.c.bf16 %v228, %v227
        %v232 = vunpack.c.l.b16 %v225
        %v233 = vunpack.c.l.b16 %v226
        %v234 = vpack.c.b16 %v233, %v232
        %vm236 = vcmask 130048
        %v238 = vsel %vm236, %v229, 0
        %240 = vmatprep.subr.bf16.mxu0 0
        %241 = vmatpush1.bf16.msra.mxu0 0
        %242 = vmatprep.subr.bf16.mxu0 0
        %243 = vmatpush1.bf16.msra.mxu0 0
        %244 = vmatprep.subr.bf16.mxu0 0
        %245 = vmatpush1.bf16.msra.mxu0 0
        %246 = vmatprep.subr.bf16.mxu0 0
        %247 = vmatpush1.bf16.msra.mxu0 0
        %248 = vmatprep.subr.bf16.mxu0 0
        %249 = vmatpush1.bf16.msra.mxu0 0
        %250 = vmatprep.subr.bf16.mxu0 0
        %251 = vmatpush1.bf16.msra.mxu0 0
        %252 = vmatprep.subr.bf16.mxu0 0
        %253 = vmatpush1.bf16.msra.mxu0 0
        %254 = vmatprep.subr.bf16.mxu0 0
        %255 = vmatpush1.bf16.msra.mxu0 %v234
        %256 = vmatprep.subr.bf16.mxu0 0
        %257 = vmatpush2.bf16.msra.mxu0 0
        %258 = vmatprep.subr.bf16.mxu0 0
        %259 = vmatpush2.bf16.msra.mxu0 0
        %260 = vmatprep.subr.bf16.mxu0 0
        %261 = vmatpush2.bf16.msra.mxu0 0
        %262 = vmatprep.subr.bf16.mxu0 0
        %263 = vmatpush2.bf16.msra.mxu0 0
        %264 = vmatprep.subr.bf16.mxu0 0
        %265 = vmatpush2.bf16.msra.mxu0 0
        %266 = vmatprep.subr.bf16.mxu0 0
        %267 = vmatpush2.bf16.msra.mxu0 0
        %268 = vmatprep.subr.bf16.mxu0 0
        %269 = vmatpush2.bf16.msra.mxu0 0
        %270 = vmatprep.subr.bf16.mxu0 0
        %271 = vmatpush2.bf16.msra.mxu0 0
        %272 = vmatprep.mubr.bf16.mxu0 0
        %273 = vmatmul.mubr.bf16.gmra.mxu0 %v238
        %v274 = vpop.f32.mrf.mxu0
        %v275 = vadd.f32 0.0, %v274
        %v276 = vpop.f32.mrf.mxu0
        %v277 = vpop.f32.mrf.mxu0
        %v278 = vadd.f32 0.0, %v277
        %v279 = vpop.f32.mrf.mxu0
        %280 = vdwg.mxu0
        %v281 = vpack.c.bf16 %v278, %v275
        %v285 = vunpack.c.l.b16 %v222
        %v286 = vunpack.c.l.b16 %v223
        %v287 = vunpack.c.l.b16 %v224
        %v288 = vpack.c.b16 %v286, %v285
        %v289 = vpack.c.b16 %v287, %v287
        %v291 = vsel %vm236, %v288, 0
        %v294 = vsel %vm236, %v289, 0
        %296 = vmatprep.subr.bf16.mxu0 0
        %297 = vmatpush1.bf16.msra.mxu0 0
        %298 = vmatprep.subr.bf16.mxu0 0
        %299 = vmatpush1.bf16.msra.mxu0 0
        %300 = vmatprep.subr.bf16.mxu0 0
        %301 = vmatpush1.bf16.msra.mxu0 0
        %302 = vmatprep.subr.bf16.mxu0 0
        %303 = vmatpush1.bf16.msra.mxu0 0
        %304 = vmatprep.subr.bf16.mxu0 0
        %305 = vmatpush1.bf16.msra.mxu0 0
        %306 = vmatprep.subr.bf16.mxu0 0
        %307 = vmatpush1.bf16.msra.mxu0 0
        %308 = vmatprep.subr.bf16.mxu0 0
        %309 = vmatpush1.bf16.msra.mxu0 0
        %310 = vmatprep.subr.bf16.mxu0 0
        %311 = vmatpush1.bf16.msra.mxu0 %v281
        %312 = vmatprep.subr.bf16.mxu0 0
        %313 = vmatpush2.bf16.msra.mxu0 0
        %314 = vmatprep.subr.bf16.mxu0 0
        %315 = vmatpush2.bf16.msra.mxu0 0
        %316 = vmatprep.subr.bf16.mxu0 0
        %317 = vmatpush2.bf16.msra.mxu0 0
        %318 = vmatprep.subr.bf16.mxu0 0
        %319 = vmatpush2.bf16.msra.mxu0 0
        %320 = vmatprep.subr.bf16.mxu0 0
        %321 = vmatpush2.bf16.msra.mxu0 0
        %322 = vmatprep.subr.bf16.mxu0 0
        %323 = vmatpush2.bf16.msra.mxu0 0
        %324 = vmatprep.subr.bf16.mxu0 0
        %325 = vmatpush2.bf16.msra.mxu0 0
        %326 = vmatprep.subr.bf16.mxu0 0
        %327 = vmatpush2.bf16.msra.mxu0 0
        %328 = vmatprep.mubr.bf16.mxu0 0
        %329 = vmatmul.mubr.bf16.gmra.mxu0 %v291
        %v330 = vpop.f32.mrf.mxu0
        %v331 = vadd.f32 0.0, %v330
        %v332 = vpop.f32.mrf.mxu0
        %v333 = vpop.f32.mrf.mxu0
        %v334 = vadd.f32 0.0, %v333
        %v335 = vpop.f32.mrf.mxu0
        %336 = vmatprep.mubr.bf16.mxu0 0
        %337 = vmatmul.mubr.bf16.gmra.mxu0 %v294
        %v338 = vpop.f32.mrf.mxu0
        %v339 = vadd.f32 0.0, %v338
        %v340 = vpop.f32.mrf.mxu0
        %v341 = vpop.f32.mrf.mxu0
        %v342 = vpop.f32.mrf.mxu0
        %343 = vdwg.mxu0
        %vm344 = vcmask 195584
        %345 = vst.msk [vmem:[%s218] sm:$0xff] %vm344, %v331
        %346 = vst.msk [vmem:[%s218 + $0x8] sm:$0xff] %vm344, %v334
        %347 = vst.msk [vmem:[%s218 + $0x10] sm:$0xff] %vm344, %v339
        %s348 = scalar_lea.vmem %s188, 16 [#allocation2]
        %v349 = vld [vmem:[%s348] sm:$0xff]
        %v350 = vld [vmem:[%s348 + $0x8] sm:$0xff]
        %v351 = vpack.c.bf16 %v350, %v349
        %v353 = vsel %vm236, %v351, 0
        %355 = vmatprep.subr.bf16.mxu0 0
        %356 = vmatpush1.bf16.msra.mxu0 0
        %357 = vmatprep.subr.bf16.mxu0 0
        %358 = vmatpush1.bf16.msra.mxu0 0
        %359 = vmatprep.subr.bf16.mxu0 0
        %360 = vmatpush1.bf16.msra.mxu0 0
        %361 = vmatprep.subr.bf16.mxu0 0
        %362 = vmatpush1.bf16.msra.mxu0 0
        %363 = vmatprep.subr.bf16.mxu0 0
        %364 = vmatpush1.bf16.msra.mxu0 0
        %365 = vmatprep.subr.bf16.mxu0 0
        %366 = vmatpush1.bf16.msra.mxu0 0
        %367 = vmatprep.subr.bf16.mxu0 0
        %368 = vmatpush1.bf16.msra.mxu0 0
        %369 = vmatprep.subr.bf16.mxu0 0
        %370 = vmatpush1.bf16.msra.mxu0 %v234
        %371 = vmatprep.subr.bf16.mxu0 0
        %372 = vmatpush2.bf16.msra.mxu0 0
        %373 = vmatprep.subr.bf16.mxu0 0
        %374 = vmatpush2.bf16.msra.mxu0 0
        %375 = vmatprep.subr.bf16.mxu0 0
        %376 = vmatpush2.bf16.msra.mxu0 0
        %377 = vmatprep.subr.bf16.mxu0 0
        %378 = vmatpush2.bf16.msra.mxu0 0
        %379 = vmatprep.subr.bf16.mxu0 0
        %380 = vmatpush2.bf16.msra.mxu0 0
        %381 = vmatprep.subr.bf16.mxu0 0
        %382 = vmatpush2.bf16.msra.mxu0 0
        %383 = vmatprep.subr.bf16.mxu0 0
        %384 = vmatpush2.bf16.msra.mxu0 0
        %385 = vmatprep.subr.bf16.mxu0 0
        %386 = vmatpush2.bf16.msra.mxu0 0
        %387 = vmatprep.mubr.bf16.mxu0 0
        %388 = vmatmul.mubr.bf16.gmra.mxu0 %v353
        %v389 = vpop.f32.mrf.mxu0
        %v390 = vadd.f32 0.0, %v389
        %v391 = vpop.f32.mrf.mxu0
        %v392 = vpop.f32.mrf.mxu0
        %v393 = vadd.f32 0.0, %v392
        %v394 = vpop.f32.mrf.mxu0
        %395 = vdwg.mxu0
        %v396 = vpack.c.bf16 %v393, %v390
        %397 = vmatprep.subr.bf16.mxu0 0
        %398 = vmatpush1.bf16.msra.mxu0 0
        %399 = vmatprep.subr.bf16.mxu0 0
        %400 = vmatpush1.bf16.msra.mxu0 0
        %401 = vmatprep.subr.bf16.mxu0 0
        %402 = vmatpush1.bf16.msra.mxu0 0
        %403 = vmatprep.subr.bf16.mxu0 0
        %404 = vmatpush1.bf16.msra.mxu0 0
        %405 = vmatprep.subr.bf16.mxu0 0
        %406 = vmatpush1.bf16.msra.mxu0 0
        %407 = vmatprep.subr.bf16.mxu0 0
        %408 = vmatpush1.bf16.msra.mxu0 0
        %409 = vmatprep.subr.bf16.mxu0 0
        %410 = vmatpush1.bf16.msra.mxu0 0
        %411 = vmatprep.subr.bf16.mxu0 0
        %412 = vmatpush1.bf16.msra.mxu0 %v396
        %413 = vmatprep.subr.bf16.mxu0 0
        %414 = vmatpush2.bf16.msra.mxu0 0
        %415 = vmatprep.subr.bf16.mxu0 0
        %416 = vmatpush2.bf16.msra.mxu0 0
        %417 = vmatprep.subr.bf16.mxu0 0
        %418 = vmatpush2.bf16.msra.mxu0 0
        %419 = vmatprep.subr.bf16.mxu0 0
        %420 = vmatpush2.bf16.msra.mxu0 0
        %421 = vmatprep.subr.bf16.mxu0 0
        %422 = vmatpush2.bf16.msra.mxu0 0
        %423 = vmatprep.subr.bf16.mxu0 0
        %424 = vmatpush2.bf16.msra.mxu0 0
        %425 = vmatprep.subr.bf16.mxu0 0
        %426 = vmatpush2.bf16.msra.mxu0 0
        %427 = vmatprep.subr.bf16.mxu0 0
        %428 = vmatpush2.bf16.msra.mxu0 0
        %429 = vmatprep.mubr.bf16.mxu0 0
        %430 = vmatmul.mubr.bf16.gmra.mxu0 %v291
        %v431 = vpop.f32.mrf.mxu0
        %v432 = vadd.f32 0.0, %v431
        %v433 = vpop.f32.mrf.mxu0
        %v434 = vpop.f32.mrf.mxu0
        %v435 = vadd.f32 0.0, %v434
        %v436 = vpop.f32.mrf.mxu0
        %437 = vmatprep.mubr.bf16.mxu0 0
        %438 = vmatmul.mubr.bf16.gmra.mxu0 %v294
        %v439 = vpop.f32.mrf.mxu0
        %v440 = vadd.f32 0.0, %v439
        %v441 = vpop.f32.mrf.mxu0
        %v442 = vpop.f32.mrf.mxu0
        %v443 = vpop.f32.mrf.mxu0
        %444 = vdwg.mxu0
        %s445 = scalar_lea.vmem %s218, 24 [#allocation8]
        %446 = vst.msk [vmem:[%s445] sm:$0xff] %vm344, %v432
        %447 = vst.msk [vmem:[%s445 + $0x8] sm:$0xff] %vm344, %v435
        %448 = vst.msk [vmem:[%s445 + $0x10] sm:$0xff] %vm344, %v440
        %s449 = scalar_lea.vmem %s188, 32 [#allocation2]
        %v450 = vld [vmem:[%s449] sm:$0xff]
        %v451 = vld [vmem:[%s449 + $0x8] sm:$0xff]
        %v452 = vpack.c.bf16 %v451, %v450
        %v454 = vsel %vm236, %v452, 0
        %456 = vmatprep.subr.bf16.mxu0 0
        %457 = vmatpush1.bf16.msra.mxu0 0
        %458 = vmatprep.subr.bf16.mxu0 0
        %459 = vmatpush1.bf16.msra.mxu0 0
        %460 = vmatprep.subr.bf16.mxu0 0
        %461 = vmatpush1.bf16.msra.mxu0 0
        %462 = vmatprep.subr.bf16.mxu0 0
        %463 = vmatpush1.bf16.msra.mxu0 0
        %464 = vmatprep.subr.bf16.mxu0 0
        %465 = vmatpush1.bf16.msra.mxu0 0
        %466 = vmatprep.subr.bf16.mxu0 0
        %467 = vmatpush1.bf16.msra.mxu0 0
        %468 = vmatprep.subr.bf16.mxu0 0
        %469 = vmatpush1.bf16.msra.mxu0 0
        %470 = vmatprep.subr.bf16.mxu0 0
        %471 = vmatpush1.bf16.msra.mxu0 %v234
        %472 = vmatprep.subr.bf16.mxu0 0
        %473 = vmatpush2.bf16.msra.mxu0 0
        %474 = vmatprep.subr.bf16.mxu0 0
        %475 = vmatpush2.bf16.msra.mxu0 0
        %476 = vmatprep.subr.bf16.mxu0 0
        %477 = vmatpush2.bf16.msra.mxu0 0
        %478 = vmatprep.subr.bf16.mxu0 0
        %479 = vmatpush2.bf16.msra.mxu0 0
        %480 = vmatprep.subr.bf16.mxu0 0
        %481 = vmatpush2.bf16.msra.mxu0 0
        %482 = vmatprep.subr.bf16.mxu0 0
        %483 = vmatpush2.bf16.msra.mxu0 0
        %484 = vmatprep.subr.bf16.mxu0 0
        %485 = vmatpush2.bf16.msra.mxu0 0
        %486 = vmatprep.subr.bf16.mxu0 0
        %487 = vmatpush2.bf16.msra.mxu0 0
        %488 = vmatprep.mubr.bf16.mxu0 0
        %489 = vmatmul.mubr.bf16.gmra.mxu0 %v454
        %v490 = vpop.f32.mrf.mxu0
        %v491 = vadd.f32 0.0, %v490
        %v492 = vpop.f32.mrf.mxu0
        %v493 = vpop.f32.mrf.mxu0
        %v494 = vadd.f32 0.0, %v493
        %v495 = vpop.f32.mrf.mxu0
        %496 = vdwg.mxu0
        %v497 = vpack.c.bf16 %v494, %v491
        %498 = vmatprep.subr.bf16.mxu0 0
        %499 = vmatpush1.bf16.msra.mxu0 0
        %500 = vmatprep.subr.bf16.mxu0 0
        %501 = vmatpush1.bf16.msra.mxu0 0
        %502 = vmatprep.subr.bf16.mxu0 0
        %503 = vmatpush1.bf16.msra.mxu0 0
        %504 = vmatprep.subr.bf16.mxu0 0
        %505 = vmatpush1.bf16.msra.mxu0 0
        %506 = vmatprep.subr.bf16.mxu0 0
        %507 = vmatpush1.bf16.msra.mxu0 0
        %508 = vmatprep.subr.bf16.mxu0 0
        %509 = vmatpush1.bf16.msra.mxu0 0
        %510 = vmatprep.subr.bf16.mxu0 0
        %511 = vmatpush1.bf16.msra.mxu0 0
        %512 = vmatprep.subr.bf16.mxu0 0
        %513 = vmatpush1.bf16.msra.mxu0 %v497
        %514 = vmatprep.subr.bf16.mxu0 0
        %515 = vmatpush2.bf16.msra.mxu0 0
        %516 = vmatprep.subr.bf16.mxu0 0
        %517 = vmatpush2.bf16.msra.mxu0 0
        %518 = vmatprep.subr.bf16.mxu0 0
        %519 = vmatpush2.bf16.msra.mxu0 0
        %520 = vmatprep.subr.bf16.mxu0 0
        %521 = vmatpush2.bf16.msra.mxu0 0
        %522 = vmatprep.subr.bf16.mxu0 0
        %523 = vmatpush2.bf16.msra.mxu0 0
        %524 = vmatprep.subr.bf16.mxu0 0
        %525 = vmatpush2.bf16.msra.mxu0 0
        %526 = vmatprep.subr.bf16.mxu0 0
        %527 = vmatpush2.bf16.msra.mxu0 0
        %528 = vmatprep.subr.bf16.mxu0 0
        %529 = vmatpush2.bf16.msra.mxu0 0
        %530 = vmatprep.mubr.bf16.mxu0 0
        %531 = vmatmul.mubr.bf16.gmra.mxu0 %v291
        %v532 = vpop.f32.mrf.mxu0
        %v533 = vadd.f32 0.0, %v532
        %v534 = vpop.f32.mrf.mxu0
        %v535 = vpop.f32.mrf.mxu0
        %v536 = vadd.f32 0.0, %v535
        %v537 = vpop.f32.mrf.mxu0
        %538 = vmatprep.mubr.bf16.mxu0 0
        %539 = vmatmul.mubr.bf16.gmra.mxu0 %v294
        %v540 = vpop.f32.mrf.mxu0
        %v541 = vadd.f32 0.0, %v540
        %v542 = vpop.f32.mrf.mxu0
        %v543 = vpop.f32.mrf.mxu0
        %v544 = vpop.f32.mrf.mxu0
        %545 = vdwg.mxu0
        %s546 = scalar_lea.vmem %s218, 48 [#allocation8]
        %547 = vst.msk [vmem:[%s546] sm:$0xff] %vm344, %v533
        %548 = vst.msk [vmem:[%s546 + $0x8] sm:$0xff] %vm344, %v536
        %549 = vst.msk [vmem:[%s546 + $0x10] sm:$0xff] %vm344, %v541
        %s550 = scalar_lea.vmem %s188, 48 [#allocation2]
        %v551 = vld [vmem:[%s550] sm:$0xff]
        %v552 = vld [vmem:[%s550 + $0x8] sm:$0xff]
        %v553 = vpack.c.bf16 %v552, %v551
        %v555 = vsel %vm236, %v553, 0
        %557 = vmatprep.subr.bf16.mxu0 0
        %558 = vmatpush1.bf16.msra.mxu0 0
        %559 = vmatprep.subr.bf16.mxu0 0
        %560 = vmatpush1.bf16.msra.mxu0 0
        %561 = vmatprep.subr.bf16.mxu0 0
        %562 = vmatpush1.bf16.msra.mxu0 0
        %563 = vmatprep.subr.bf16.mxu0 0
        %564 = vmatpush1.bf16.msra.mxu0 0
        %565 = vmatprep.subr.bf16.mxu0 0
        %566 = vmatpush1.bf16.msra.mxu0 0
        %567 = vmatprep.subr.bf16.mxu0 0
        %568 = vmatpush1.bf16.msra.mxu0 0
        %569 = vmatprep.subr.bf16.mxu0 0
        %570 = vmatpush1.bf16.msra.mxu0 0
        %571 = vmatprep.subr.bf16.mxu0 0
        %572 = vmatpush1.bf16.msra.mxu0 %v234
        %573 = vmatprep.subr.bf16.mxu0 0
        %574 = vmatpush2.bf16.msra.mxu0 0
        %575 = vmatprep.subr.bf16.mxu0 0
        %576 = vmatpush2.bf16.msra.mxu0 0
        %577 = vmatprep.subr.bf16.mxu0 0
        %578 = vmatpush2.bf16.msra.mxu0 0
        %579 = vmatprep.subr.bf16.mxu0 0
        %580 = vmatpush2.bf16.msra.mxu0 0
        %581 = vmatprep.subr.bf16.mxu0 0
        %582 = vmatpush2.bf16.msra.mxu0 0
        %583 = vmatprep.subr.bf16.mxu0 0
        %584 = vmatpush2.bf16.msra.mxu0 0
        %585 = vmatprep.subr.bf16.mxu0 0
        %586 = vmatpush2.bf16.msra.mxu0 0
        %587 = vmatprep.subr.bf16.mxu0 0
        %588 = vmatpush2.bf16.msra.mxu0 0
        %589 = vmatprep.mubr.bf16.mxu0 0
        %590 = vmatmul.mubr.bf16.gmra.mxu0 %v555
        %v591 = vpop.f32.mrf.mxu0
        %v592 = vadd.f32 0.0, %v591
        %v593 = vpop.f32.mrf.mxu0
        %v594 = vpop.f32.mrf.mxu0
        %v595 = vadd.f32 0.0, %v594
        %v596 = vpop.f32.mrf.mxu0
        %597 = vdwg.mxu0
        %v598 = vpack.c.bf16 %v595, %v592
        %599 = vmatprep.subr.bf16.mxu0 0
        %600 = vmatpush1.bf16.msra.mxu0 0
        %601 = vmatprep.subr.bf16.mxu0 0
        %602 = vmatpush1.bf16.msra.mxu0 0
        %603 = vmatprep.subr.bf16.mxu0 0
        %604 = vmatpush1.bf16.msra.mxu0 0
        %605 = vmatprep.subr.bf16.mxu0 0
        %606 = vmatpush1.bf16.msra.mxu0 0
        %607 = vmatprep.subr.bf16.mxu0 0
        %608 = vmatpush1.bf16.msra.mxu0 0
        %609 = vmatprep.subr.bf16.mxu0 0
        %610 = vmatpush1.bf16.msra.mxu0 0
        %611 = vmatprep.subr.bf16.mxu0 0
        %612 = vmatpush1.bf16.msra.mxu0 0
        %613 = vmatprep.subr.bf16.mxu0 0
        %614 = vmatpush1.bf16.msra.mxu0 %v598
        %615 = vmatprep.subr.bf16.mxu0 0
        %616 = vmatpush2.bf16.msra.mxu0 0
        %617 = vmatprep.subr.bf16.mxu0 0
        %618 = vmatpush2.bf16.msra.mxu0 0
        %619 = vmatprep.subr.bf16.mxu0 0
        %620 = vmatpush2.bf16.msra.mxu0 0
        %621 = vmatprep.subr.bf16.mxu0 0
        %622 = vmatpush2.bf16.msra.mxu0 0
        %623 = vmatprep.subr.bf16.mxu0 0
        %624 = vmatpush2.bf16.msra.mxu0 0
        %625 = vmatprep.subr.bf16.mxu0 0
        %626 = vmatpush2.bf16.msra.mxu0 0
        %627 = vmatprep.subr.bf16.mxu0 0
        %628 = vmatpush2.bf16.msra.mxu0 0
        %629 = vmatprep.subr.bf16.mxu0 0
        %630 = vmatpush2.bf16.msra.mxu0 0
        %631 = vmatprep.mubr.bf16.mxu0 0
        %632 = vmatmul.mubr.bf16.gmra.mxu0 %v291
        %v633 = vpop.f32.mrf.mxu0
        %v634 = vadd.f32 0.0, %v633
        %v635 = vpop.f32.mrf.mxu0
        %v636 = vpop.f32.mrf.mxu0
        %v637 = vadd.f32 0.0, %v636
        %v638 = vpop.f32.mrf.mxu0
        %639 = vmatprep.mubr.bf16.mxu0 0
        %640 = vmatmul.mubr.bf16.gmra.mxu0 %v294
        %v641 = vpop.f32.mrf.mxu0
        %v642 = vadd.f32 0.0, %v641
        %v643 = vpop.f32.mrf.mxu0
        %v644 = vpop.f32.mrf.mxu0
        %v645 = vpop.f32.mrf.mxu0
        %646 = vdwg.mxu0
        %s647 = scalar_lea.vmem %s218, 72 [#allocation8]
        %648 = vst.msk [vmem:[%s647] sm:$0xff] %vm344, %v634
        %649 = vst.msk [vmem:[%s647 + $0x8] sm:$0xff] %vm344, %v637
        %650 = vst.msk [vmem:[%s647 + $0x10] sm:$0xff] %vm344, %v642
        %s651 = sand.u32 %s97, 1
        %s652 = scalar_lea.sflag [#allocation4], %s651
        %s653 = sand.u32 %s97, 1
        %s654 = smul.addr %s653, 96
        %s655 = scalar_lea.vmem [#allocation8], %s654
        // Predicated region
        $region45: #{_pallas_bilinear_resize.1} parent=31 // pred_check
          %p656 = pneg %p107
        $region46: #{_pallas_bilinear_resize.1} parent=31 // pred_check_branch
          %658 = sbr.rel (%p656) target = $region48
        $region47: #{_pallas_bilinear_resize.1} parent=31 // pred_region
          %s659 = smul.u32 4, %s21
          %s661 = ssub.s32 1536, 1536
          %662 = vsyncadd %s652, %s661
          %s663 = smul.addr %s659, 3
          %s664 = smul.addr %s663, 128
          %s665 = scalar_lea.hbm %s3, %s664
          %s666 = sshll.u32 %s655, 4
          %s667 = int_to_ptr.vmem [resolvable:$true] %s666
          %672 = dma.vmem_to_hbm [thread:$0]  %s667, 1536, %s665, %s652, 128, 128, 8
        $region48: #{_pallas_bilinear_resize.1} parent=31 // pred_fallthru
          _
      $region32: #{_pallas_bilinear_resize.1} parent=5 // pred_fallthru
        _
      %p673 = scmp.le.s32.totalorder 2, %s16
      // Predicated region
      $region49: #{_pallas_bilinear_resize.1} parent=5 // pred_check
        %p674 = pneg %p673
      $region50: #{_pallas_bilinear_resize.1} parent=5 // pred_check_branch
        %676 = sbr.rel (%p674) target = $region52
      $region51: #{_pallas_bilinear_resize.1} parent=5 // pred_region
        %s677 = ssub.s32 %s16, 2
        // Predicated region
        $region53: #{_pallas_bilinear_resize.1} parent=51 // pred_check
          %p678 = pneg %p113
        $region54: #{_pallas_bilinear_resize.1} parent=51 // pred_check_branch
          %680 = sbr.rel (%p678) target = $region56
        $region55: #{_pallas_bilinear_resize.1} parent=51 // pred_region
          %s681 = sand.u32 %s98, 1
          %s682 = scalar_lea.sflag [#allocation4], %s681
          %s683 = sand.u32 %s98, 1
          %s684 = smul.addr %s683, 96
          %s685 = scalar_lea.vmem [#allocation8], %s684
          %686 = dma.done %s682, 1536
        $region56: #{_pallas_bilinear_resize.1} parent=51 // pred_fallthru
          _
      $region52: #{_pallas_bilinear_resize.1} parent=5 // pred_fallthru
        _
    $region6: #{_pallas_bilinear_resize.1} parent=1 // loop_footer
      %s20 = sadd.s32 1, %s16
    $region7: #{_pallas_bilinear_resize.1} parent=1 // loop_footer_branch
      %15 = sbr.rel target = $region3
    $region8: #{_pallas_bilinear_resize.1} parent=1 // loop_exit
      _
    %687 = vsyncpa [#allocation3], 1
    %s688 = scalar_lea.sflag [#allocation3], 1
    %689 = vsyncpa %s688, 1
    %690 = vsyncpa [#allocation6], 1
    %691 = vsyncpa [#allocation4], 1
    %s692 = scalar_lea.sflag [#allocation4], 1
    %693 = vsyncpa %s692, 1

</llo_original>
